<compile_context>
chip_gen: v7x
topology: tpu7x:2x2x1
jax: 0.10.0
libtpu: 0.0.40
codegen_flags: <defaults>
</compile_context>

<pallas_src>
import functools

import jax
import jax.numpy as jnp
from jax.experimental import pallas as pl
from jax.experimental.pallas import tpu as pltpu

# ----------------------------- configuration -------------------------------
NUM_NODES = 128          # graph.num_nodes()
TRIALS    = 8            # params.trials  (Bernoulli trials per node)
EPSILON   = 0.01         # params.epsilon
PROB      = 0.5 + EPSILON
STEPS     = 8            # forward calls batched into one kernel launch


# --------------------------- dtype / tile selection --------------------------
def select_operand_dtype():
    """MXU operand dtype per TPU generation (exact for 0/1 and ints <= 8)."""
    kind = jax.devices()[0].device_kind.lower()
    if "v7" in kind or "7x" in kind:
        return jnp.float8_e4m3fn     # v7x: no int MXU; fp8 halves HBM bytes vs bf16
    if "v5" in kind or "v6" in kind:
        return jnp.int8              # v5e/v6e: int8 MXU; half of bf16 HBM traffic
    return jnp.bfloat16              # safe default (exact for these values)


def choose_tiles(n):
    """Returns (tile_k, tile_n, n_pad): lane/output axis gets the bigger tile."""
    n_pad = pl.cdiv(n, 128) * 128
    if n_pad <= 1024:
        return n_pad, n_pad, n_pad                   # single tile each way
    tile_k, tile_n = 512, 1024
    n_pad = pl.cdiv(n, tile_n) * tile_n               # multiple of both tiles
    return tile_k, tile_n, n_pad


# ------------------------ hoisted adjacency preparation ----------------------
def prepare_adjacency(adjacency, n_pad, op_dtype):
    """Pad, transpose and cast the (static) adjacency ONCE per graph.

    Pre-transposing makes the in-kernel matmul output lane-dense (destination
    nodes on the 128-wide lane axis); the low-precision cast is exact for a
    0/1 adjacency and shrinks the HBM stream of the memory-bound aggregation.
    """
    n = adjacency.shape[0]
    if n_pad != n:
        adjacency = jnp.pad(adjacency, ((0, n_pad - n), (0, n_pad - n)))
    return adjacency.T.astype(op_dtype)


# ------------------------- aggregation (send_and_recv) -----------------------
def _aggregate_kernel(pay_ref, adjt_ref, agg_ref, *, acc_dtype):
    """Copy source payoffs + sum-reduce at destination == P @ A^T on the MXU.

    pay_ref  : VMEM (1, 2, tile_k)       low-precision payoffs (src k-tile)
    adjt_ref : VMEM (tile_k, tile_n)     A^T block (src k-tile x dst n-tile)
    agg_ref  : VMEM (1, 2, tile_n) f32   per-destination mailbox sum (accumulator)
    """
    # TODO(synk): messagefn()/reducefn() are abstract in PolyGraphOp; this is
    # the canonical copy-payoffs + sum aggregation used by concrete subclasses.
    k = pl.program_id(2)

    @pl.when(k == 0)
    def _():
        agg_ref[...] = jnp.zeros_like(agg_ref)

    agg_ref[0] += jnp.dot(pay_ref[0], adjt_ref[...],
                          preferred_element_type=acc_dtype).astype(jnp.float32)


def _aggregate(payoffs_op, adj_t, *, tile_k, tile_n, acc_dtype):
    steps, _, n_pad = payoffs_op.shape
    grid = (steps, n_pad // tile_n, n_pad // tile_k)
    op_bytes = jnp.dtype(payoffs_op.dtype).itemsize
    kernel = functools.partial(_aggregate_kernel, acc_dtype=acc_dtype)
    return pl.pallas_call(
        kernel,
        grid=grid,
        out_shape=jax.ShapeDtypeStruct((steps, 2, n_pad), jnp.float32),
        in_specs=(
            pl.BlockSpec((1, 2, tile_k), lambda s, i, k: (s, 0, k)),
            # TODO(synk): pipeline_mode=pl.Buffered(3) here if profiling shows
            # exposed DMA between strided A^T block fetches at large N.
            pl.BlockSpec((tile_k, tile_n), lambda s, i, k: (k, i)),
        ),
        out_specs=pl.BlockSpec((1, 2, tile_n), lambda s, i, k: (s, 0, i)),
        compiler_params=pltpu.CompilerParams(
            dimension_semantics=("parallel", "parallel", "arbitrary")),
        cost_estimate=pl.CostEstimate(
            flops=steps * 2 * 2 * n_pad * n_pad,             # (2,N)@(N,N) per step
            transcendentals=0,
            bytes_accessed=steps * (n_pad * n_pad * op_bytes
                                    + (n_pad // tile_n) * 2 * n_pad * op_bytes
                                    + 2 * n_pad * 4),
        ),
    )(payoffs_op, adj_t)


# ------------------------------ forward pass --------------------------------
def _experiment(beliefs, uniforms, *, trials, prob):
    """experiment(): binomial sample (sum of Bernoulli trials) masked by belief > 0.5.

    O(trials*N) elementwise glue kept in the wrapper (per the perf review) so
    the kernel never re-streams uniforms once per destination tile.
    """
    mask = (beliefs > 0.5).astype(jnp.float32)                          # (N,)
    sample = jnp.sum((uniforms < prob).astype(jnp.float32), axis=1)     # (S, N)
    trials_row = jnp.broadcast_to(jnp.float32(trials) * mask, sample.shape)
    return jnp.stack((sample * mask, trials_row), axis=1)               # (S, 2, N)


@functools.partial(jax.jit,
                   static_argnames=("trials", "prob", "op_dtype", "tile_k", "tile_n"))
def polygraph_forward(adj_t, beliefs, uniforms, *, trials, prob, op_dtype,
                      tile_k, tile_n):
    """PolyGraphOp.forward, batched over `steps` independent experiments:
    experiment -> filter (all edges kept) -> send_and_recv (copy + sum) ->
    identity applyfn -> return beliefs (unchanged)."""
    n = beliefs.shape[0]
    n_pad = adj_t.shape[0]

    payoffs = _experiment(beliefs, uniforms, trials=trials, prob=prob)   # (S,2,N) f32
    pay_pad = payoffs
    if n_pad != n:
        pay_pad = jnp.pad(payoffs, ((0, 0), (0, 0), (0, n_pad - n)))

    acc_dtype = jnp.int32 if jnp.issubdtype(op_dtype, jnp.integer) else jnp.float32
    agg = _aggregate(pay_pad.astype(op_dtype), adj_t,
                     tile_k=tile_k, tile_n=tile_n, acc_dtype=acc_dtype)

    # forward() returns graph.ndata['beliefs'] (identity applyfn).
    return (beliefs,
            jnp.swapaxes(payoffs, 1, 2),            # (S, N, 2) == result.T per step
            jnp.swapaxes(agg[:, :, :n], 1, 2))      # (S, N, 2) mailbox sums


# ---------------------------------- main -------------------------------------
if __name__ == "__main__":
    key = jax.random.PRNGKey(0)
    k_beliefs, k_sample, k_sample2 = jax.random.split(key, 3)

    # graph.ndata['beliefs'] = init.init((N,), params.init) -> uniform [0, 1)
    beliefs = jax.random.uniform(k_beliefs, (NUM_NODES,), dtype=jnp.float32)

    # graph.ndata['logits'] = self._sampler.logits (metadata; unused by forward)
    logits = jnp.full((NUM_NODES,), jnp.log(PROB / (1.0 - PROB)), dtype=jnp.float32)

    # Deterministic dense adjacency (base filterfn keeps all edges):
    # ring graph with both neighbours, edge weight 1.0.  adjacency[dst, src].
    eye = jnp.eye(NUM_NODES, dtype=jnp.float32)
    adjacency = jnp.roll(eye, 1, axis=1) + jnp.roll(eye, -1, axis=1)

    # Binomial(total_count=trials, probs=prob) == sum of `trials` Bernoulli(p)
    # draws.  Uniforms come from jax.random (pltpu.prng_* has no interpret
    # lowering); STEPS independent forward calls share one kernel launch.
    uniforms = jax.random.uniform(k_sample, (STEPS, TRIALS, NUM_NODES),
                                  dtype=jnp.float32)

    tile_k, tile_n, n_pad = choose_tiles(NUM_NODES)
    op_dtype = select_operand_dtype()

    def run(dtype):
        # Hoisted once per (static) graph; reused by every forward call below.
        adj_t = prepare_adjacency(adjacency, n_pad, dtype)
        outs = polygraph_forward(adj_t, beliefs, uniforms,
                                 trials=TRIALS, prob=PROB, op_dtype=dtype,
                                 tile_k=tile_k, tile_n=tile_n)
        jax.block_until_ready(outs)
        # Second batch of steps reuses the cached adjacency + compiled kernel.
        uniforms2 = jax.random.uniform(k_sample2, (STEPS, TRIALS, NUM_NODES),
                                       dtype=jnp.float32)
        outs2 = polygraph_forward(adj_t, beliefs, uniforms2,
                                  trials=TRIALS, prob=PROB, op_dtype=dtype,
                                  tile_k=tile_k, tile_n=tile_n)
        jax.block_until_ready(outs2)
        return outs

    try:
        out_beliefs, payoffs, aggregated = run(op_dtype)
    except Exception:
        # Generation-specific low-precision path failed to lower on this chip;
        # bf16 is exact for 0/1 adjacency and integer payoffs <= trials.
        op_dtype = jnp.bfloat16
        out_beliefs, payoffs, aggregated = run(op_dtype)

    # ----------------------------- sanity checks -----------------------------
    assert out_beliefs.shape == (NUM_NODES,)
    assert payoffs.shape == (STEPS, NUM_NODES, 2)
    assert aggregated.shape == (STEPS, NUM_NODES, 2)
    low = (beliefs <= 0.5)[None, :]
    # nodes with belief <= 0.5 must have zero payoffs (mask semantics)
    assert bool(jnp.all(jnp.where(low,
                                  (payoffs[..., 0] == 0) & (payoffs[..., 1] == 0),
                                  payoffs[..., 1] == float(TRIALS))))
    # samples bounded by trial count
    assert bool(jnp.all((payoffs[..., 0] >= 0) & (payoffs[..., 0] <= TRIALS)))
    # forward returns beliefs unchanged (identity applyfn in the base class)
    assert bool(jnp.all(out_beliefs == beliefs))
    # aggregation matches the reference A @ payoffs (copy + sum over in-edges)
    ref_agg = jnp.einsum('nm,smc->snc', adjacency, payoffs)
    assert bool(jnp.allclose(aggregated, ref_agg, atol=1e-3))

    print("KERNEL_OK")
</pallas_src>

<mosaic_0001>
module attributes {stable_mosaic.version = 11 : i64} {
  func.func @_aggregate_kernel(%arg0: i32, %arg1: i32, %arg2: i32, %arg3: memref<1x2x128xbf16, #tpu.memory_space<vmem>>, %arg4: memref<128x128xbf16, #tpu.memory_space<vmem>>, %arg5: memref<1x2x128xf32, #tpu.memory_space<vmem>>) attributes {dimension_semantics = [#tpu.dimension_semantics<parallel>, #tpu.dimension_semantics<parallel>, #tpu.dimension_semantics<arbitrary>], iteration_bounds = array<i64: 8, 1, 1>, scalar_prefetch = 0 : i64, scratch_operands = 0 : i64, tpu.core_type = #tpu.core_type<tc>, window_params = [{transform_indices = @transform_0, window_bounds = array<i64: 1, 2, 128>}, {transform_indices = @transform_1, window_bounds = array<i64: 128, 128>}, {transform_indices = @transform_2, window_bounds = array<i64: 1, 2, 128>}]} {
    %c0_i32 = arith.constant 0 : i32
    %0 = arith.cmpi eq, %arg2, %c0_i32 : i32
    %1 = arith.extui %0 : i1 to i32
    %c0_i32_0 = arith.constant 0 : i32
    %2 = arith.cmpi ne, %1, %c0_i32_0 : i32
    scf.if %2 {
      %cst_11 = arith.constant 0.000000e+00 : f32
      %13 = vector.broadcast %cst_11 : f32 to vector<1x2x128xf32>
      %c0_12 = arith.constant 0 : index
      %c0_13 = arith.constant 0 : index
      %c0_14 = arith.constant 0 : index
      %14 = vector.load %arg5[%c0_12, %c0_13, %c0_14] : memref<1x2x128xf32, #tpu.memory_space<vmem>>, vector<1x2x128xf32>
      tpu.vector_store %arg5[%c0_12, %c0_13, %c0_14], %13 {strides = array<i32>} : memref<1x2x128xf32, #tpu.memory_space<vmem>>, vector<1x2x128xf32>,
    } else {
    }
    %c0 = arith.constant 0 : index
    %c0_1 = arith.constant 0 : index
    %c0_2 = arith.constant 0 : index
    %3 = vector.load %arg5[%c0, %c0_1, %c0_2] : memref<1x2x128xf32, #tpu.memory_space<vmem>>, vector<1x2x128xf32>
    %4 = vector.shape_cast %3 : vector<1x2x128xf32> to vector<2x128xf32>
    %c0_3 = arith.constant 0 : index
    %c0_4 = arith.constant 0 : index
    %c0_5 = arith.constant 0 : index
    %5 = vector.load %arg3[%c0_3, %c0_4, %c0_5] : memref<1x2x128xbf16, #tpu.memory_space<vmem>>, vector<1x2x128xbf16>
    %6 = vector.shape_cast %5 : vector<1x2x128xbf16> to vector<2x128xbf16>
    %c0_6 = arith.constant 0 : index
    %c0_7 = arith.constant 0 : index
    %7 = vector.load %arg4[%c0_6, %c0_7] : memref<128x128xbf16, #tpu.memory_space<vmem>>, vector<128x128xbf16>
    %cst = arith.constant dense<0.000000e+00> : vector<2x128xf32>
    %8 = tpu.matmul %6, %7, %cst {dimension_numbers = #tpu.dot_dimension_numbers<[1], [0], [0], [1], [0, 0, 1, 1], [], []>} : vector<2x128xbf16>, vector<128x128xbf16>, vector<2x128xf32> -> vector<2x128xf32>
    %9 = arith.addf %4, %8 : vector<2x128xf32>
    %c0_8 = arith.constant 0 : index
    %c0_9 = arith.constant 0 : index
    %c0_10 = arith.constant 0 : index
    %10 = vector.load %arg5[%c0_8, %c0_9, %c0_10] : memref<1x2x128xf32, #tpu.memory_space<vmem>>, vector<1x2x128xf32>
    %11 = vector.shape_cast %10 : vector<1x2x128xf32> to vector<2x128xf32>
    %12 = vector.shape_cast %9 : vector<2x128xf32> to vector<1x2x128xf32>
    tpu.vector_store %arg5[%c0_8, %c0_9, %c0_10], %12 {strides = array<i32>} : memref<1x2x128xf32, #tpu.memory_space<vmem>>, vector<1x2x128xf32>,
    return
  }
  func.func @transform_0(%arg0: i32, %arg1: i32, %arg2: i32) -> (i32, i32, i32) {
    %c0_i32 = arith.constant 0 : i32
    %c0_i32_0 = arith.constant 0 : i32
    return %arg0, %c0_i32, %arg2 : i32, i32, i32
  }
  func.func @transform_1(%arg0: i32, %arg1: i32, %arg2: i32) -> (i32, i32) {
    %c0_i32 = arith.constant 0 : i32
    return %arg2, %arg1 : i32, i32
  }
  func.func @transform_2(%arg0: i32, %arg1: i32, %arg2: i32) -> (i32, i32, i32) {
    %c0_i32 = arith.constant 0 : i32
    %c0_i32_0 = arith.constant 0 : i32
    return %arg0, %c0_i32, %arg1 : i32, i32, i32
  }
}

</mosaic_0001>

<llo_original>
// kernel: polygraph_forward.1
$region0: #{polygraph_forward.1}
  #allocation0 [shape = 'u32[]', space=smem, size = 0x4, offset = 0x4, fixed_abs, tag = 'smem constant byte address 0x4 - core index']
  #allocation1 [shape = 'u32[144,128]{1,0:T(1,128)}', space=vmem, size = 0x12000, scoped, tag = 'internal scratch']
  %s0 = inlined_call_operand.vmem [shape: bf16[8,2,128], index: 0, kind: input, shape index: {}]
  %s1 = inlined_call_operand.vmem [shape: bf16[128,128], index: 1, kind: input, shape index: {}]
  %s2 = inlined_call_operand.hbm [shape: f32[8,2,128], index: 2, kind: output, shape index: {}]
  %s3 = sld [smem:[#allocation0]]
  $region45: #{polygraph_forward.1} parent=0
    _
  %s5 = ssub.s32 1, %s3
  %s6 = scalar_select 0, %s5, %s3
  $region1: #{polygraph_forward.1} parent=0
    #allocation2 [shape = 'u8[2048]{0}', space=vmem, size = 0x800, scoped, tag = 'output window, operand 0']
    #allocation3 [shape = 's32[2]{0}', space=sflag, size = 0x8, scoped, tag = 'scoped memory for polygraph_forward.1']
    %7 = vsyncpa [#allocation3], 0
    %s8 = scalar_lea.sflag [#allocation3], 1
    %9 = vsyncpa %s8, 0
    loop: start=0, step=1, limit=10
    $region2: #{polygraph_forward.1} parent=1 // loop_pre_header
      _
    $region3: #{polygraph_forward.1} parent=1 // loop_header
      %s11 = sphi 0, %s15
      %p12 = scmp.ge.s32.totalorder %s11, 10
      %s18 = sphi 0, %s37
      %s19 = sphi 0, %s33
      %s20 = sphi 0, %s29
      %s21 = sphi 0, %s18
      %s22 = sphi 0, %s19
      %s23 = sphi 0, %s20
      %s24 = sphi 0, %s21
      %s25 = sphi 0, %s22
      %s26 = sphi 0, %s23
      %s42 = sphi 0, %s44
      %s45 = sphi 0, %s42
      %s46 = sphi 0, %s45
      %s62 = sphi 0, %s46
      %s70 = sphi 0, %s72
      %s73 = sphi 0, %s70
      %s74 = sphi 0, %s73
      %s90 = sphi 0, %s74
      %s98 = sphi 0, %s100
      %s101 = sphi 0, %s98
      %s102 = sphi 0, %s101
      %s118 = sphi 0, %s102
    $region4: #{polygraph_forward.1} parent=1 // loop_header_branch
      %14 = sbr.rel (%p12) target = $region8
    $region5: #{polygraph_forward.1} parent=1 // loop_body
      %s16 = ssub.s32 %s11, 1
      %s17 = ssub.s32 %s11, 2
      %s27 = sadd.s32 1, %s20
      %p28 = scmp.ge.s32.totalorder %s27, 1
      %s29 = scalar_select %p28, 0, %s27
      %s30 = sadd.s32 1, %s19
      %s31 = scalar_select %p28, %s30, %s19
      %p32 = scmp.ge.s32.totalorder %s31, 1
      %s33 = scalar_select %p32, 0, %s31
      %s34 = sadd.s32 1, %s18
      %s35 = scalar_select %p32, %s34, %s18
      %p36 = scmp.ge.s32.totalorder %s35, 8
      %s37 = scalar_select %p36, 0, %s35
      %s38 = ssub.s32 %s18, %s37
      %s39 = ssub.s32 %s20, %s29
      %s40 = sor.u32 %s38, %s39
      %p41 = scmp.eq.s32.totalorder %s40, 0
      %s43 = sadd.s32 %s42, 1
      %s44 = scalar_select %p41, %s42, %s43
      %p47 = pneg %p41
      %p48 = scmp.eq.s32.totalorder %s11, 7
      %p49 = por %p47, %p48
      %p50 = scmp.ne.s32.totalorder %s42, %s45
      %p51 = scmp.eq.s32.totalorder %s11, 0
      %p52 = por %p50, %p51
      %p53 = scmp.ne.s32.totalorder %s42, %s45
      %p54 = scmp.eq.s32.totalorder %s16, 7
      %p55 = por %p53, %p54
      %p56 = scmp.ne.s32.totalorder %s45, %s46
      %p57 = scmp.eq.s32.totalorder %s16, 0
      %p58 = por %p56, %p57
      %p59 = scmp.ne.s32.totalorder %s45, %s46
      %p60 = scmp.eq.s32.totalorder %s17, 7
      %p61 = por %p59, %p60
      %p63 = scmp.ne.s32.totalorder %s46, %s62
      %p64 = scmp.eq.s32.totalorder %s17, 0
      %p65 = por %p63, %p64
      %s66 = ssub.s32 %s20, %s29
      %s67 = ssub.s32 %s19, %s33
      %s68 = sor.u32 %s66, %s67
      %p69 = scmp.eq.s32.totalorder %s68, 0
      %s71 = sadd.s32 %s70, 1
      %s72 = scalar_select %p69, %s70, %s71
      %p75 = pneg %p69
      %p76 = scmp.eq.s32.totalorder %s11, 7
      %p77 = por %p75, %p76
      %p78 = scmp.ne.s32.totalorder %s70, %s73
      %p79 = scmp.eq.s32.totalorder %s11, 0
      %p80 = por %p78, %p79
      %p81 = scmp.ne.s32.totalorder %s70, %s73
      %p82 = scmp.eq.s32.totalorder %s16, 7
      %p83 = por %p81, %p82
      %p84 = scmp.ne.s32.totalorder %s73, %s74
      %p85 = scmp.eq.s32.totalorder %s16, 0
      %p86 = por %p84, %p85
      %p87 = scmp.ne.s32.totalorder %s73, %s74
      %p88 = scmp.eq.s32.totalorder %s17, 7
      %p89 = por %p87, %p88
      %p91 = scmp.ne.s32.totalorder %s74, %s90
      %p92 = scmp.eq.s32.totalorder %s17, 0
      %p93 = por %p91, %p92
      %s94 = ssub.s32 %s18, %s37
      %s95 = ssub.s32 %s19, %s33
      %s96 = sor.u32 %s94, %s95
      %p97 = scmp.eq.s32.totalorder %s96, 0
      %s99 = sadd.s32 %s98, 1
      %s100 = scalar_select %p97, %s98, %s99
      %p103 = pneg %p97
      %p104 = scmp.eq.s32.totalorder %s11, 7
      %p105 = por %p103, %p104
      %p106 = scmp.ne.s32.totalorder %s98, %s101
      %p107 = scmp.eq.s32.totalorder %s11, 0
      %p108 = por %p106, %p107
      %p109 = scmp.ne.s32.totalorder %s98, %s101
      %p110 = scmp.eq.s32.totalorder %s16, 7
      %p111 = por %p109, %p110
      %p112 = scmp.ne.s32.totalorder %s101, %s102
      %p113 = scmp.eq.s32.totalorder %s16, 0
      %p114 = por %p112, %p113
      %p115 = scmp.ne.s32.totalorder %s101, %s102
      %p116 = scmp.eq.s32.totalorder %s17, 7
      %p117 = por %p115, %p116
      %p119 = scmp.ne.s32.totalorder %s102, %s118
      %p120 = scmp.eq.s32.totalorder %s17, 0
      %p121 = por %p119, %p120
      %p122 = scmp.le.s32.totalorder 1, %s11
      %p123 = scmp.lt.s32.totalorder %s11, 9
      %p124 = pnand %p122, %p123
      %p125 = pneg %p124
      // Predicated region
      $region9: #{polygraph_forward.1} parent=5 // pred_check
        _
      $region10: #{polygraph_forward.1} parent=5 // pred_check_branch
        %127 = sbr.rel (%p124) target = $region12
      $region11: #{polygraph_forward.1} parent=5 // pred_region
        %s128 = ssub.s32 %s11, 1
        // Predicated region
        $region13: #{polygraph_forward.1} parent=11 // pred_check
          %p129 = pneg %p86
        $region14: #{polygraph_forward.1} parent=11 // pred_check_branch
          %131 = sbr.rel (%p129) target = $region16
        $region15: #{polygraph_forward.1} parent=11 // pred_region
          %s132 = smul.u32 16, %s23
          %p133 = scmp.lt.s32.totalorder %s132, 15
          %s134 = scalar_select %p133, %s132, 15
          %p135 = scmp.lt.s32.totalorder %s22, 0
          %s136 = scalar_select %p135, %s22, 0
          %s137 = sadd.s32 %s136, %s134
          %s138 = smul.addr %s137, 4
          %s139 = scalar_lea.vmem %s1, %s138
          %s140 = smul.u32 16, %s23
        $region16: #{polygraph_forward.1} parent=11 // pred_fallthru
          _
      $region12: #{polygraph_forward.1} parent=5 // pred_fallthru
        _
      %p141 = scmp.lt.s32.totalorder %s11, 8
      // Predicated region
      $region17: #{polygraph_forward.1} parent=5 // pred_check
        %p142 = pneg %p141
      $region18: #{polygraph_forward.1} parent=5 // pred_check_branch
        %144 = sbr.rel (%p142) target = $region20
      $region19: #{polygraph_forward.1} parent=5 // pred_region
        // Predicated region
        $region21: #{polygraph_forward.1} parent=19 // pred_check
          %p145 = pneg %p52
        $region22: #{polygraph_forward.1} parent=19 // pred_check_branch
          %147 = sbr.rel (%p145) target = $region24
        $region23: #{polygraph_forward.1} parent=19 // pred_region
          %p148 = scmp.lt.s32.totalorder %s18, 7
          %s149 = scalar_select %p148, %s18, 7
          %p150 = scmp.lt.s32.totalorder %s20, 0
          %s151 = scalar_select %p150, %s20, 0
          %s152 = sadd.s32 %s151, %s149
          %s153 = scalar_lea.vmem %s0, %s152
        $region24: #{polygraph_forward.1} parent=19 // pred_fallthru
          _
      $region20: #{polygraph_forward.1} parent=5 // pred_fallthru
        _
      %p154 = scmp.le.s32.totalorder 1, %s11
      %p155 = scmp.lt.s32.totalorder %s11, 9
      %p156 = pnand %p154, %p155
      %p157 = pneg %p156
      // Predicated region
      $region25: #{polygraph_forward.1} parent=5 // pred_check
        _
      $region26: #{polygraph_forward.1} parent=5 // pred_check_branch
        %159 = sbr.rel (%p156) target = $region28
      $region27: #{polygraph_forward.1} parent=5 // pred_region
        %s160 = ssub.s32 %s11, 1
        %p161 = scmp.lt.s32.totalorder %s21, 7
        %s162 = scalar_select %p161, %s21, 7
        %p163 = scmp.lt.s32.totalorder %s23, 0
        %s164 = scalar_select %p163, %s23, 0
        %s165 = sadd.s32 %s164, %s162
        %s166 = scalar_lea.vmem %s0, %s165
        %p167 = pneg %p58
        %p168 = pneg %p55
        %s169 = smul.u32 16, %s23
        %p170 = scmp.lt.s32.totalorder %s169, 15
        %s171 = scalar_select %p170, %s169, 15
        %p172 = scmp.lt.s32.totalorder %s22, 0
        %s173 = scalar_select %p172, %s22, 0
        %s174 = sadd.s32 %s173, %s171
        %s175 = smul.addr %s174, 4
        %s176 = scalar_lea.vmem %s1, %s175
        %p177 = pneg %p86
        %p178 = pneg %p83
        %p179 = pneg %p114
        %p180 = pneg %p111
        %s181 = sand.u32 %s101, 1
        %s182 = scalar_lea.sflag [#allocation3], %s181
        %s183 = sand.u32 %s101, 1
        %s184 = smul.addr %s183, 2
        %s185 = scalar_lea.vmem [#allocation2], %s184
        %p186 = scmp.lt.s32.totalorder %s21, 7
        %s187 = scalar_select %p186, %s21, 7
        %p188 = scmp.lt.s32.totalorder %s23, 0
        %s189 = scalar_select %p188, %s23, 0
        %s190 = sadd.s32 %s189, %s187
        %s191 = scalar_lea.vmem %s0, %s190
        %s192 = smul.u32 16, %s23
        %p193 = scmp.lt.s32.totalorder %s192, 15
        %s194 = scalar_select %p193, %s192, 15
        %p195 = scmp.lt.s32.totalorder %s22, 0
        %s196 = scalar_select %p195, %s22, 0
        %s197 = sadd.s32 %s196, %s194
        %s198 = smul.addr %s197, 4
        %s199 = scalar_lea.vmem %s1, %s198
        %s200 = smul.u32 16, %s23
        %p202 = scmp.eq.s32.totalorder %s23, 0
        // Predicated region
        $region29: #{polygraph_forward.1} parent=27 // pred_check
          %p203 = pneg %p202
        $region30: #{polygraph_forward.1} parent=27 // pred_check_branch
          %205 = sbr.rel (%p203) target = $region32
        $region31: #{polygraph_forward.1} parent=27 // pred_region
          %206 = vst [vmem:[%s185] sm:$0x3] 0.0
        $region32: #{polygraph_forward.1} parent=27 // pred_fallthru
          _
        %v207 = vld [vmem:[%s185] sm:$0x3]
        %v208 = vld [vmem:[%s191] sm:$0x1]
        %v209 = vld [vmem:[%s199] sm:$0xf]
        %v210 = vld [vmem:[%s199 + $0x4] sm:$0xf]
        %v211 = vld [vmem:[%s199 + $0x8] sm:$0xf]
        %v212 = vld [vmem:[%s199 + $0xc] sm:$0xf]
        %v213 = vld [vmem:[%s199 + $0x10] sm:$0xf]
        %v214 = vld [vmem:[%s199 + $0x14] sm:$0xf]
        %v215 = vld [vmem:[%s199 + $0x18] sm:$0xf]
        %v216 = vld [vmem:[%s199 + $0x1c] sm:$0xf]
        %v217 = vld [vmem:[%s199 + $0x20] sm:$0xf]
        %v218 = vld [vmem:[%s199 + $0x24] sm:$0xf]
        %v219 = vld [vmem:[%s199 + $0x28] sm:$0xf]
        %v220 = vld [vmem:[%s199 + $0x2c] sm:$0xf]
        %v221 = vld [vmem:[%s199 + $0x30] sm:$0xf]
        %v222 = vld [vmem:[%s199 + $0x34] sm:$0xf]
        %v223 = vld [vmem:[%s199 + $0x38] sm:$0xf]
        %v224 = vld [vmem:[%s199 + $0x3c] sm:$0xf]
        %v241 = vunpack.c.l.b16 %v209
        %v242 = vunpack.c.l.b16 %v210
        %v243 = vunpack.c.l.b16 %v211
        %v244 = vunpack.c.l.b16 %v212
        %v245 = vunpack.c.l.b16 %v213
        %v246 = vunpack.c.l.b16 %v214
        %v247 = vunpack.c.l.b16 %v215
        %v248 = vunpack.c.l.b16 %v216
        %v249 = vunpack.c.l.b16 %v217
        %v250 = vunpack.c.l.b16 %v218
        %v251 = vunpack.c.l.b16 %v219
        %v252 = vunpack.c.l.b16 %v220
        %v253 = vunpack.c.l.b16 %v221
        %v254 = vunpack.c.l.b16 %v222
        %v255 = vunpack.c.l.b16 %v223
        %v256 = vunpack.c.l.b16 %v224
        %v257 = vpack.c.b16 %v242, %v241
        %v258 = vpack.c.b16 %v244, %v243
        %v259 = vpack.c.b16 %v246, %v245
        %v260 = vpack.c.b16 %v248, %v247
        %v261 = vpack.c.b16 %v250, %v249
        %v262 = vpack.c.b16 %v252, %v251
        %v263 = vpack.c.b16 %v254, %v253
        %v264 = vpack.c.b16 %v256, %v255
        %273 = vmatprep.subr.bf16.mxu0 0
        %274 = vmatpush1.bf16.msra.mxu0 %v257
        %275 = vmatprep.subr.bf16.mxu0 0
        %276 = vmatpush1.bf16.msra.mxu0 %v258
        %277 = vmatprep.subr.bf16.mxu0 0
        %278 = vmatpush1.bf16.msra.mxu0 %v259
        %279 = vmatprep.subr.bf16.mxu0 0
        %280 = vmatpush1.bf16.msra.mxu0 %v260
        %281 = vmatprep.subr.bf16.mxu0 0
        %282 = vmatpush1.bf16.msra.mxu0 %v261
        %283 = vmatprep.subr.bf16.mxu0 0
        %284 = vmatpush1.bf16.msra.mxu0 %v262
        %285 = vmatprep.subr.bf16.mxu0 0
        %286 = vmatpush1.bf16.msra.mxu0 %v263
        %287 = vmatprep.subr.bf16.mxu0 0
        %288 = vmatpush1.bf16.msra.mxu0 %v264
        %289 = vmatprep.subr.bf16.mxu0 0
        %290 = vmatpush1.bf16.msra.mxu0 0
        %291 = vmatprep.subr.bf16.mxu0 0
        %292 = vmatpush1.bf16.msra.mxu0 0
        %293 = vmatprep.subr.bf16.mxu0 0
        %294 = vmatpush1.bf16.msra.mxu0 0
        %295 = vmatprep.subr.bf16.mxu0 0
        %296 = vmatpush1.bf16.msra.mxu0 0
        %297 = vmatprep.subr.bf16.mxu0 0
        %298 = vmatpush1.bf16.msra.mxu0 0
        %299 = vmatprep.subr.bf16.mxu0 0
        %300 = vmatpush1.bf16.msra.mxu0 0
        %301 = vmatprep.subr.bf16.mxu0 0
        %302 = vmatpush1.bf16.msra.mxu0 0
        %303 = vmatprep.subr.bf16.mxu0 0
        %304 = vmatpush1.bf16.msra.mxu0 0
        %305 = vmatprep.mubr.bf16.mxu0 0
        %306 = vmatmul.mubr.bf16.gmra.mrb[0].mxu0 %v208
        %v307 = vpop.f32.mrb[0].mxu0
        %v308 = vadd.f32 0.0, %v307
        %v309 = vpop.f32.mrb[0].mxu0
        %v310 = vpop.f32.mrb[0].mxu0
        %v311 = vpop.f32.mrb[0].mxu0
        %312 = vdwg.mxu0
        %v313 = vadd.f32 %v207, %v308
        %314 = vst [vmem:[%s185] sm:$0x3] %v313
        %s315 = sand.u32 %s101, 1
        %s316 = scalar_lea.sflag [#allocation3], %s315
        %s317 = sand.u32 %s101, 1
        %s318 = smul.addr %s317, 2
        %s319 = scalar_lea.vmem [#allocation2], %s318
        // Predicated region
        $region33: #{polygraph_forward.1} parent=27 // pred_check
          %p320 = pneg %p111
        $region34: #{polygraph_forward.1} parent=27 // pred_check_branch
          %322 = sbr.rel (%p320) target = $region36
        $region35: #{polygraph_forward.1} parent=27 // pred_region
          %s324 = ssub.s32 32, 32
          %325 = vsyncadd %s316, %s324
          %s326 = sadd.s32 %s22, %s21
          %s327 = smul.addr %s326, 32
          %s328 = scalar_lea.hbm %s2, %s327
          %s330 = sshll.u32 %s319, 4
          %s331 = int_to_ptr.vmem [resolvable:$true] %s330
          %333 = dma.vmem_to_hbm [thread:$0]  %s331, 32, %s328, %s316
        $region36: #{polygraph_forward.1} parent=27 // pred_fallthru
          _
      $region28: #{polygraph_forward.1} parent=5 // pred_fallthru
        _
      %p334 = scmp.le.s32.totalorder 2, %s11
      // Predicated region
      $region37: #{polygraph_forward.1} parent=5 // pred_check
        %p335 = pneg %p334
      $region38: #{polygraph_forward.1} parent=5 // pred_check_branch
        %337 = sbr.rel (%p335) target = $region40
      $region39: #{polygraph_forward.1} parent=5 // pred_region
        %s338 = ssub.s32 %s11, 2
        // Predicated region
        $region41: #{polygraph_forward.1} parent=39 // pred_check
          %p339 = pneg %p117
        $region42: #{polygraph_forward.1} parent=39 // pred_check_branch
          %341 = sbr.rel (%p339) target = $region44
        $region43: #{polygraph_forward.1} parent=39 // pred_region
          %s342 = sand.u32 %s102, 1
          %s343 = scalar_lea.sflag [#allocation3], %s342
          %s344 = sand.u32 %s102, 1
          %s345 = smul.addr %s344, 2
          %s346 = scalar_lea.vmem [#allocation2], %s345
          %347 = dma.done %s343, 32
        $region44: #{polygraph_forward.1} parent=39 // pred_fallthru
          _
      $region40: #{polygraph_forward.1} parent=5 // pred_fallthru
        _
    $region6: #{polygraph_forward.1} parent=1 // loop_footer
      %s15 = sadd.s32 1, %s11
    $region7: #{polygraph_forward.1} parent=1 // loop_footer_branch
      %10 = sbr.rel target = $region3
    $region8: #{polygraph_forward.1} parent=1 // loop_exit
      _
    %348 = vsyncpa [#allocation3], 1
    %s349 = scalar_lea.sflag [#allocation3], 1
    %350 = vsyncpa %s349, 1

</llo_original>
